<compile_context>
chip_gen: v7x
topology: tpu7x:2x2x1
jax: 0.10.0
libtpu: 0.0.40
codegen_flags: <defaults>
</compile_context>

<pallas_src>
import functools

import jax
import jax.numpy as jnp
from jax import lax
from jax.experimental import pallas as pl


def block_kernel(xcol_ref, w_ref, gmask2_ref, seg_ref, segt_ref, gb_ref, o_ref, *,
                 groups, n_spatial):
    c_out = w_ref.shape[0]
    gsz = c_out // groups

    # --- Conv2d(3x3, padding=1) + bias: one fused bf16 MXU matmul, f32 accumulation.
    # xcol carries a trailing ones row and w a trailing bias column, so the bias add is free.
    y = jnp.dot(w_ref[...], xcol_ref[...],
                preferred_element_type=jnp.float32)                   # (C_out, B*N) f32

    # --- GroupNorm statistics (one pass, f32).
    # Per-(sample, channel) sums via lane-segment matmuls: seg[n, b] = 1 iff lane n is sample b.
    s = jnp.dot(y, seg_ref[...], preferred_element_type=jnp.float32)        # (C_out, B)
    sq = jnp.dot(y * y, seg_ref[...], preferred_element_type=jnp.float32)   # (C_out, B)
    st = jnp.concatenate([s, sq], axis=0)                                   # (2*C_out, B)

    # One block-diagonal "same group" mask matmul aggregates per group AND broadcasts the
    # group sums back to every channel of the group (mask duplicated for [sum; sumsq]).
    g = jnp.dot(gmask2_ref[...], st, preferred_element_type=jnp.float32)    # (2*C_out, B)
    inv_cnt = 1.0 / float(gsz * n_spatial)
    mean = g[:c_out] * inv_cnt                                              # (C_out, B)
    var = g[c_out:] * inv_cnt - mean * mean
    rstd = lax.rsqrt(var + 1e-5)                                            # EUP

    # Fold normalization + affine into per-(channel, sample) scale/shift (tiny vectors).
    gb = gb_ref[...]                                                        # (C_out, 2)
    gamma = gb[:, 0:1]
    beta = gb[:, 1:2]
    scale = gamma * rstd                                                    # (C_out, B)
    shift = beta - mean * scale                                             # (C_out, B)

    # Broadcast scale/shift across each sample's lane segment with one small matmul, then the
    # full-tensor epilogue is a single multiply-add + SiLU.
    full = jnp.dot(jnp.concatenate([scale, shift], axis=0), segt_ref[...],
                   preferred_element_type=jnp.float32)                      # (2*C_out, B*N)
    yn = y * full[:c_out] + full[c_out:]

    # --- SiLU (sigmoid on the EUP), lane-dense f32 store.
    o_ref[...] = yn * jax.nn.sigmoid(yn)


def block_forward(x, w, b, gamma, beta, groups):
    """x: (B, C_in, H, W); w: (C_out, C_in, 3, 3); b/gamma/beta: (C_out,)."""
    bsz, c_in, h, wd = x.shape
    c_out = w.shape[0]
    n = h * wd
    bn = bsz * n
    assert c_out % groups == 0
    gsz = c_out // groups

    # im2col (layout plumbing in the wrapper): (9*C_in, B*N), taps (dy, dx, c_in)-ordered,
    # lanes sample-major.  A trailing ones row folds the conv bias into the matmul.
    xf = x.astype(jnp.float32)
    xp = jnp.pad(xf, ((0, 0), (0, 0), (1, 1), (1, 1)))
    cols = [xp[:, :, dy:dy + h, dx:dx + wd].reshape(bsz, c_in, n)
            for dy in range(3) for dx in range(3)]
    xcol = jnp.concatenate(cols, axis=1)                                   # (B, 9*C_in, N)
    xcol = jnp.transpose(xcol, (1, 0, 2)).reshape(9 * c_in, bn)            # (9*C_in, B*N)
    xcol = jnp.concatenate([xcol, jnp.ones((1, bn), jnp.float32)], axis=0)
    xcol = xcol.astype(jnp.bfloat16)                                       # (9*C_in+1, B*N)

    # Weight flattened to the same (dy, dx, c_in) ordering, bias as the last K column.
    w_flat = jnp.transpose(w, (0, 2, 3, 1)).reshape(c_out, 9 * c_in).astype(jnp.float32)
    w_aug = jnp.concatenate([w_flat, b.reshape(c_out, 1).astype(jnp.float32)], axis=1)
    w_aug = w_aug.astype(jnp.bfloat16)                                     # (C_out, 9*C_in+1)

    # Grid-invariant constants (built once in the wrapper, not per step in the kernel).
    gid = jnp.arange(c_out, dtype=jnp.int32) // gsz
    gmask = (gid[:, None] == gid[None, :]).astype(jnp.float32)             # (C_out, C_out)
    gmask2 = jnp.kron(jnp.eye(2, dtype=jnp.float32), gmask)                # (2C_out, 2C_out)

    lane_sample = jnp.arange(bn, dtype=jnp.int32) // n
    seg = (lane_sample[:, None] == jnp.arange(bsz, dtype=jnp.int32)[None, :]).astype(jnp.float32)
    segt = seg.T                                                           # (B, B*N)

    gb = jnp.stack([gamma.astype(jnp.float32), beta.astype(jnp.float32)], axis=1)  # (C_out, 2)

    kernel = functools.partial(block_kernel, groups=groups, n_spatial=n)

    # Single invocation (grid=()): everything fits VMEM at these sizes, so there is no
    # per-sample pipeline overhead.  All operands are auto-copied into VMEM.
    out = pl.pallas_call(
        kernel,
        out_shape=jax.ShapeDtypeStruct((c_out, bn), jnp.float32),
    )(xcol, w_aug, gmask2, seg, segt, gb)

    return out.reshape(c_out, bsz, n).transpose(1, 0, 2).reshape(bsz, c_out, h, wd)


def block_reference(x, w, b, gamma, beta, groups):
    """Pure-JAX reference mirroring the PyTorch forward (conv3x3 -> GroupNorm -> SiLU)."""
    y = lax.conv_general_dilated(
        x, w, window_strides=(1, 1), padding=((1, 1), (1, 1)),
        dimension_numbers=("NCHW", "OIHW", "NCHW"))
    y = y + b.reshape(1, -1, 1, 1)
    bsz, c, h, wd = y.shape
    g = c // groups
    yg = y.reshape(bsz, groups, g, h, wd)
    mean = yg.mean(axis=(2, 3, 4), keepdims=True)
    var = ((yg - mean) ** 2).mean(axis=(2, 3, 4), keepdims=True)
    yg = (yg - mean) / jnp.sqrt(var + 1e-5)
    y = yg.reshape(bsz, c, h, wd)
    y = gamma.reshape(1, c, 1, 1) * y + beta.reshape(1, c, 1, 1)
    return y * jax.nn.sigmoid(y)


if __name__ == "__main__":
    B, DIM_IN, DIM_OUT, H, W, GROUPS = 2, 4, 8, 16, 16, 2

    key = jax.random.PRNGKey(0)
    kx, kw, kb, kg, kbe = jax.random.split(key, 5)

    x = jax.random.normal(kx, (B, DIM_IN, H, W), dtype=jnp.float32)
    # Parameter shapes follow nn.Conv2d / nn.GroupNorm in __init__.
    w = jax.random.normal(kw, (DIM_OUT, DIM_IN, 3, 3), dtype=jnp.float32) * 0.1
    b = jax.random.normal(kb, (DIM_OUT,), dtype=jnp.float32) * 0.1
    gamma = 1.0 + 0.1 * jax.random.normal(kg, (DIM_OUT,), dtype=jnp.float32)
    beta = 0.1 * jax.random.normal(kbe, (DIM_OUT,), dtype=jnp.float32)

    out = jax.block_until_ready(block_forward(x, w, b, gamma, beta, GROUPS))
    assert out.shape == (B, DIM_OUT, H, W)

    # Tight check against a reference whose conv operands are rounded to bf16 (the kernel's
    # MXU operand precision); loose check against the pure-f32 reference (bf16 rounding of
    # x/w is the only systematic difference).
    xq = x.astype(jnp.bfloat16).astype(jnp.float32)
    wq = w.astype(jnp.bfloat16).astype(jnp.float32)
    bq = b.astype(jnp.bfloat16).astype(jnp.float32)
    ref_bf = block_reference(xq, wq, bq, gamma, beta, GROUPS)
    ref_f32 = block_reference(x, w, b, gamma, beta, GROUPS)
    assert jnp.allclose(out, ref_bf, atol=2e-3, rtol=2e-3), "mismatch vs bf16-operand reference"
    assert jnp.allclose(out, ref_f32, atol=5e-2, rtol=5e-2), "mismatch vs f32 reference"

    print("KERNEL_OK")
</pallas_src>

<mosaic_0001>
module attributes {stable_mosaic.version = 11 : i64} {
  func.func @block_kernel(%arg0: memref<37x512xbf16, #tpu.memory_space<vmem>>, %arg1: memref<8x37xbf16, #tpu.memory_space<vmem>>, %arg2: memref<16x16xf32, #tpu.memory_space<vmem>>, %arg3: memref<512x2xf32, #tpu.memory_space<vmem>>, %arg4: memref<2x512xf32, #tpu.memory_space<vmem>>, %arg5: memref<8x2xf32, #tpu.memory_space<vmem>>, %arg6: memref<8x512xf32, #tpu.memory_space<vmem>>) attributes {dimension_semantics = [], scalar_prefetch = 0 : i64, scratch_operands = 0 : i64, tpu.core_type = #tpu.core_type<tc>} {
    %c0 = arith.constant 0 : index
    %c0_0 = arith.constant 0 : index
    %0 = vector.load %arg1[%c0, %c0_0] : memref<8x37xbf16, #tpu.memory_space<vmem>>, vector<8x37xbf16>
    %c0_1 = arith.constant 0 : index
    %c0_2 = arith.constant 0 : index
    %1 = vector.load %arg0[%c0_1, %c0_2] : memref<37x512xbf16, #tpu.memory_space<vmem>>, vector<37x512xbf16>
    %cst = arith.constant dense<0.000000e+00> : vector<8x512xf32>
    %2 = tpu.matmul %0, %1, %cst {dimension_numbers = #tpu.dot_dimension_numbers<[1], [0], [0], [1], [0, 0, 1, 1], [], []>} : vector<8x37xbf16>, vector<37x512xbf16>, vector<8x512xf32> -> vector<8x512xf32>
    %c0_3 = arith.constant 0 : index
    %c0_4 = arith.constant 0 : index
    %3 = vector.load %arg3[%c0_3, %c0_4] : memref<512x2xf32, #tpu.memory_space<vmem>>, vector<512x2xf32>
    %cst_5 = arith.constant dense<0.000000e+00> : vector<8x2xf32>
    %4 = tpu.matmul %2, %3, %cst_5 {dimension_numbers = #tpu.dot_dimension_numbers<[1], [0], [0], [1], [0, 0, 1, 1], [], []>} : vector<8x512xf32>, vector<512x2xf32>, vector<8x2xf32> -> vector<8x2xf32>
    %5 = arith.mulf %2, %2 : vector<8x512xf32>
    %c0_6 = arith.constant 0 : index
    %c0_7 = arith.constant 0 : index
    %6 = vector.load %arg3[%c0_6, %c0_7] : memref<512x2xf32, #tpu.memory_space<vmem>>, vector<512x2xf32>
    %cst_8 = arith.constant dense<0.000000e+00> : vector<8x2xf32>
    %7 = tpu.matmul %5, %6, %cst_8 {dimension_numbers = #tpu.dot_dimension_numbers<[1], [0], [0], [1], [0, 0, 1, 1], [], []>} : vector<8x512xf32>, vector<512x2xf32>, vector<8x2xf32> -> vector<8x2xf32>
    %8 = tpu.concatenate %4, %7 in 0 : vector<8x2xf32>, vector<8x2xf32> -> vector<16x2xf32>
    %c0_9 = arith.constant 0 : index
    %c0_10 = arith.constant 0 : index
    %9 = vector.load %arg2[%c0_9, %c0_10] : memref<16x16xf32, #tpu.memory_space<vmem>>, vector<16x16xf32>
    %cst_11 = arith.constant dense<0.000000e+00> : vector<16x2xf32>
    %10 = tpu.matmul %9, %8, %cst_11 {dimension_numbers = #tpu.dot_dimension_numbers<[1], [0], [0], [1], [0, 0, 1, 1], [], []>} : vector<16x16xf32>, vector<16x2xf32>, vector<16x2xf32> -> vector<16x2xf32>
    %11 = vector.extract_strided_slice %10 {offsets = [0, 0], sizes = [8, 2], strides = [1, 1]} : vector<16x2xf32> to vector<8x2xf32>
    %cst_12 = arith.constant 9.765625E-4 : f32
    %12 = vector.broadcast %cst_12 : f32 to vector<8x2xf32>
    %13 = arith.mulf %11, %12 : vector<8x2xf32>
    %14 = vector.extract_strided_slice %10 {offsets = [8, 0], sizes = [8, 2], strides = [1, 1]} : vector<16x2xf32> to vector<8x2xf32>
    %cst_13 = arith.constant 9.765625E-4 : f32
    %15 = vector.broadcast %cst_13 : f32 to vector<8x2xf32>
    %16 = arith.mulf %14, %15 : vector<8x2xf32>
    %17 = arith.mulf %13, %13 : vector<8x2xf32>
    %18 = arith.subf %16, %17 : vector<8x2xf32>
    %cst_14 = arith.constant 9.99999974E-6 : f32
    %19 = vector.broadcast %cst_14 : f32 to vector<8x2xf32>
    %20 = arith.addf %18, %19 : vector<8x2xf32>
    %21 = math.rsqrt %20 : vector<8x2xf32>
    %c0_15 = arith.constant 0 : index
    %c0_16 = arith.constant 0 : index
    %22 = vector.load %arg5[%c0_15, %c0_16] : memref<8x2xf32, #tpu.memory_space<vmem>>, vector<8x2xf32>
    %23 = vector.extract_strided_slice %22 {offsets = [0, 0], sizes = [8, 1], strides = [1, 1]} : vector<8x2xf32> to vector<8x1xf32>
    %24 = vector.extract_strided_slice %22 {offsets = [0, 1], sizes = [8, 1], strides = [1, 1]} : vector<8x2xf32> to vector<8x1xf32>
    %25 = vector.broadcast %23 : vector<8x1xf32> to vector<8x2xf32>
    %26 = arith.mulf %25, %21 : vector<8x2xf32>
    %27 = arith.mulf %13, %26 : vector<8x2xf32>
    %28 = vector.broadcast %24 : vector<8x1xf32> to vector<8x2xf32>
    %29 = arith.subf %28, %27 : vector<8x2xf32>
    %30 = tpu.concatenate %26, %29 in 0 : vector<8x2xf32>, vector<8x2xf32> -> vector<16x2xf32>
    %c0_17 = arith.constant 0 : index
    %c0_18 = arith.constant 0 : index
    %31 = vector.load %arg4[%c0_17, %c0_18] : memref<2x512xf32, #tpu.memory_space<vmem>>, vector<2x512xf32>
    %cst_19 = arith.constant dense<0.000000e+00> : vector<16x512xf32>
    %32 = tpu.matmul %30, %31, %cst_19 {dimension_numbers = #tpu.dot_dimension_numbers<[1], [0], [0], [1], [0, 0, 1, 1], [], []>} : vector<16x2xf32>, vector<2x512xf32>, vector<16x512xf32> -> vector<16x512xf32>
    %33 = vector.extract_strided_slice %32 {offsets = [0, 0], sizes = [8, 512], strides = [1, 1]} : vector<16x512xf32> to vector<8x512xf32>
    %34 = arith.mulf %2, %33 : vector<8x512xf32>
    %35 = vector.extract_strided_slice %32 {offsets = [8, 0], sizes = [8, 512], strides = [1, 1]} : vector<16x512xf32> to vector<8x512xf32>
    %36 = arith.addf %34, %35 : vector<8x512xf32>
    %37 = arith.negf %36 : vector<8x512xf32>
    %38 = math.exp %37 : vector<8x512xf32>
    %cst_20 = arith.constant 1.000000e+00 : f32
    %39 = vector.broadcast %cst_20 : f32 to vector<8x512xf32>
    %40 = arith.addf %39, %38 : vector<8x512xf32>
    %41 = arith.divf %39, %40 : vector<8x512xf32>
    %42 = arith.mulf %36, %41 : vector<8x512xf32>
    %c0_21 = arith.constant 0 : index
    %c0_22 = arith.constant 0 : index
    %43 = vector.load %arg6[%c0_21, %c0_22] : memref<8x512xf32, #tpu.memory_space<vmem>>, vector<8x512xf32>
    tpu.vector_store %arg6[%c0_21, %c0_22], %42 {strides = array<i32>} : memref<8x512xf32, #tpu.memory_space<vmem>>, vector<8x512xf32>,
    return
  }
}

</mosaic_0001>

<llo_original>
// kernel: tpu_custom_call.1
$region0: #{tpu_custom_call.1}
  #allocation0 [shape = 'u32[]', space=smem, size = 0x4, offset = 0x4, fixed_abs, tag = 'smem constant byte address 0x4 - core index']
  #allocation1 [shape = 'u32[144,128]{1,0:T(1,128)}', space=vmem, size = 0x12000, scoped, tag = 'internal scratch']
  %s0 = inlined_call_operand.vmem [shape: bf16[37,512], index: 0, kind: input, shape index: {}]
  %s1 = inlined_call_operand.vmem [shape: bf16[8,37], index: 1, kind: input, shape index: {}]
  %s2 = inlined_call_operand.vmem [shape: f32[16,16], index: 2, kind: input, shape index: {}]
  %s3 = inlined_call_operand.vmem [shape: f32[512,2], index: 3, kind: input, shape index: {}]
  %s4 = inlined_call_operand.vmem [shape: f32[2,512], index: 4, kind: input, shape index: {}]
  %s5 = inlined_call_operand.vmem [shape: f32[8,2], index: 5, kind: input, shape index: {}]
  %s6 = inlined_call_operand.hbm [shape: f32[8,512], index: 6, kind: output, shape index: {}]
  %s7 = sld [smem:[#allocation0]]
  $region34: #{tpu_custom_call.1} parent=0
    _
  %s9 = ssub.s32 1, %s7
  %s10 = scalar_select 0, %s9, %s7
  $region1: #{tpu_custom_call.1} parent=0
    #allocation2 [shape = 'u8[16384]{0}', space=vmem, size = 0x4000, scoped, tag = 'output window, operand 0, single buffered']
    #allocation3 [shape = 's32[1]{0}', space=sflag, size = 0x4, scoped, tag = 'scoped memory for tpu_custom_call.1']
    %11 = vsyncpa [#allocation3], 0
    // Predicated region
    $region2: #{tpu_custom_call.1} parent=1 // pred_check
      _
    $region3: #{tpu_custom_call.1} parent=1 // pred_check_branch
      %13 = sbr.rel (0) target = $region5
    $region4: #{tpu_custom_call.1} parent=1 // pred_region
      _
    $region5: #{tpu_custom_call.1} parent=1 // pred_fallthru
      _
    // Predicated region
    $region6: #{tpu_custom_call.1} parent=1 // pred_check
      _
    $region7: #{tpu_custom_call.1} parent=1 // pred_check_branch
      %15 = sbr.rel (0) target = $region9
    $region8: #{tpu_custom_call.1} parent=1 // pred_region
      _
    $region9: #{tpu_custom_call.1} parent=1 // pred_fallthru
      _
    // Predicated region
    $region10: #{tpu_custom_call.1} parent=1 // pred_check
      _
    $region11: #{tpu_custom_call.1} parent=1 // pred_check_branch
      %17 = sbr.rel (0) target = $region13
    $region12: #{tpu_custom_call.1} parent=1 // pred_region
      _
    $region13: #{tpu_custom_call.1} parent=1 // pred_fallthru
      _
    // Predicated region
    $region14: #{tpu_custom_call.1} parent=1 // pred_check
      _
    $region15: #{tpu_custom_call.1} parent=1 // pred_check_branch
      %19 = sbr.rel (0) target = $region17
    $region16: #{tpu_custom_call.1} parent=1 // pred_region
      _
    $region17: #{tpu_custom_call.1} parent=1 // pred_fallthru
      _
    // Predicated region
    $region18: #{tpu_custom_call.1} parent=1 // pred_check
      _
    $region19: #{tpu_custom_call.1} parent=1 // pred_check_branch
      %21 = sbr.rel (0) target = $region21
    $region20: #{tpu_custom_call.1} parent=1 // pred_region
      _
    $region21: #{tpu_custom_call.1} parent=1 // pred_fallthru
      _
    // Predicated region
    $region22: #{tpu_custom_call.1} parent=1 // pred_check
      _
    $region23: #{tpu_custom_call.1} parent=1 // pred_check_branch
      %23 = sbr.rel (0) target = $region25
    $region24: #{tpu_custom_call.1} parent=1 // pred_region
      _
    $region25: #{tpu_custom_call.1} parent=1 // pred_fallthru
      _
    %v25 = vld [vmem:[%s1] sm:$0xf]
    %v26 = vld [vmem:[%s0] sm:$0xff]
    %v27 = vld [vmem:[%s0 + $0x8] sm:$0xff]
    %v28 = vld [vmem:[%s0 + $0x10] sm:$0xff]
    %v29 = vld [vmem:[%s0 + $0x18] sm:$0xff]
    %v30 = vld [vmem:[%s0 + $0x20] sm:$0xff]
    %v31 = vld [vmem:[%s0 + $0x28] sm:$0xff]
    %v32 = vld [vmem:[%s0 + $0x30] sm:$0xff]
    %v33 = vld [vmem:[%s0 + $0x38] sm:$0xff]
    %v34 = vld [vmem:[%s0 + $0x40] sm:$0x77]
    %v35 = vld [vmem:[%s0 + $0x48] sm:$0x77]
    %v46 = vunpack.c.l.b16 %v26
    %v47 = vunpack.c.h.b16 %v26
    %v48 = vunpack.c.l.b16 %v27
    %v49 = vunpack.c.h.b16 %v27
    %v50 = vunpack.c.l.b16 %v28
    %v51 = vunpack.c.h.b16 %v28
    %v52 = vunpack.c.l.b16 %v29
    %v53 = vunpack.c.h.b16 %v29
    %v54 = vunpack.c.l.b16 %v30
    %v55 = vunpack.c.h.b16 %v30
    %v56 = vunpack.c.l.b16 %v31
    %v57 = vunpack.c.h.b16 %v31
    %v58 = vunpack.c.l.b16 %v32
    %v59 = vunpack.c.h.b16 %v32
    %v60 = vunpack.c.l.b16 %v33
    %v61 = vunpack.c.h.b16 %v33
    %v62 = vunpack.c.l.b16 %v34
    %v63 = vunpack.c.h.b16 %v34
    %v64 = vunpack.c.l.b16 %v35
    %v65 = vunpack.c.h.b16 %v35
    %v66 = vpack.c.b16 %v50, %v46
    %v67 = vpack.c.b16 %v51, %v47
    %v68 = vpack.c.b16 %v52, %v48
    %v69 = vpack.c.b16 %v53, %v49
    %v70 = vpack.c.b16 %v58, %v54
    %v71 = vpack.c.b16 %v59, %v55
    %v72 = vpack.c.b16 %v60, %v56
    %v73 = vpack.c.b16 %v61, %v57
    %v74 = vpack.c.b16 %v62, %v62
    %v75 = vpack.c.b16 %v63, %v63
    %v76 = vpack.c.b16 %v64, %v64
    %v77 = vpack.c.b16 %v65, %v65
    %vm86 = vcmask 302080
    %v88 = vsel %vm86, %v25, 0
    %vm90 = vcmask 1041408
    %vm91 = vcmask 1042432
    %v92 = vsel %vm90, 4294967295, 65535
    %v93 = vsel %vm91, %v92, 0
    %v95 = vand.u32 %v74, %v93
    %v98 = vand.u32 %v75, %v93
    %v101 = vand.u32 %v76, %v93
    %v104 = vand.u32 %v77, %v93
    %106 = vmatprep.subr.bf16.mxu0 %v67
    %107 = vmatpush1.bf16.msra.mxu0 %v66
    %108 = vmatprep.subr.bf16.mxu0 %v71
    %109 = vmatpush1.bf16.msra.mxu0 %v70
    %110 = vmatprep.subr.bf16.mxu0 %v98
    %111 = vmatpush1.bf16.msra.mxu0 %v95
    %112 = vmatprep.subr.bf16.mxu0 0
    %113 = vmatpush1.bf16.msra.mxu0 0
    %114 = vmatprep.subr.bf16.mxu0 0
    %115 = vmatpush1.bf16.msra.mxu0 0
    %116 = vmatprep.subr.bf16.mxu0 0
    %117 = vmatpush1.bf16.msra.mxu0 0
    %118 = vmatprep.subr.bf16.mxu0 0
    %119 = vmatpush1.bf16.msra.mxu0 0
    %120 = vmatprep.subr.bf16.mxu0 0
    %121 = vmatpush1.bf16.msra.mxu0 0
    %122 = vmatprep.subr.bf16.mxu0 0
    %123 = vmatpush1.bf16.msra.mxu0 0
    %124 = vmatprep.subr.bf16.mxu0 0
    %125 = vmatpush1.bf16.msra.mxu0 0
    %126 = vmatprep.subr.bf16.mxu0 0
    %127 = vmatpush1.bf16.msra.mxu0 0
    %128 = vmatprep.subr.bf16.mxu0 0
    %129 = vmatpush1.bf16.msra.mxu0 0
    %130 = vmatprep.subr.bf16.mxu0 0
    %131 = vmatpush1.bf16.msra.mxu0 0
    %132 = vmatprep.subr.bf16.mxu0 0
    %133 = vmatpush1.bf16.msra.mxu0 0
    %134 = vmatprep.subr.bf16.mxu0 0
    %135 = vmatpush1.bf16.msra.mxu0 0
    %136 = vmatprep.subr.bf16.mxu0 0
    %137 = vmatpush1.bf16.msra.mxu0 0
    %138 = vmatprep.mubr.bf16.mxu0 0
    %139 = vmatmul.mubr.bf16.gmra.mrb[0].mxu0 %v88
    %v140 = vpop.f32.mrb[0].mxu0
    %v141 = vadd.f32 0.0, %v140
    %v142 = vpop.f32.mrb[0].mxu0
    %v143 = vadd.f32 0.0, %v142
    %v144 = vpop.f32.mrb[0].mxu0
    %v145 = vpop.f32.mrb[0].mxu0
    %146 = vdwg.mxu0
    %147 = vmatprep.subr.bf16.mxu0 %v69
    %148 = vmatpush1.bf16.msra.mxu0 %v68
    %149 = vmatprep.subr.bf16.mxu0 %v73
    %150 = vmatpush1.bf16.msra.mxu0 %v72
    %151 = vmatprep.subr.bf16.mxu0 %v104
    %152 = vmatpush1.bf16.msra.mxu0 %v101
    %153 = vmatprep.subr.bf16.mxu0 0
    %154 = vmatpush1.bf16.msra.mxu0 0
    %155 = vmatprep.subr.bf16.mxu0 0
    %156 = vmatpush1.bf16.msra.mxu0 0
    %157 = vmatprep.subr.bf16.mxu0 0
    %158 = vmatpush1.bf16.msra.mxu0 0
    %159 = vmatprep.subr.bf16.mxu0 0
    %160 = vmatpush1.bf16.msra.mxu0 0
    %161 = vmatprep.subr.bf16.mxu0 0
    %162 = vmatpush1.bf16.msra.mxu0 0
    %163 = vmatprep.subr.bf16.mxu0 0
    %164 = vmatpush1.bf16.msra.mxu0 0
    %165 = vmatprep.subr.bf16.mxu0 0
    %166 = vmatpush1.bf16.msra.mxu0 0
    %167 = vmatprep.subr.bf16.mxu0 0
    %168 = vmatpush1.bf16.msra.mxu0 0
    %169 = vmatprep.subr.bf16.mxu0 0
    %170 = vmatpush1.bf16.msra.mxu0 0
    %171 = vmatprep.subr.bf16.mxu0 0
    %172 = vmatpush1.bf16.msra.mxu0 0
    %173 = vmatprep.subr.bf16.mxu0 0
    %174 = vmatpush1.bf16.msra.mxu0 0
    %175 = vmatprep.subr.bf16.mxu0 0
    %176 = vmatpush1.bf16.msra.mxu0 0
    %177 = vmatprep.subr.bf16.mxu0 0
    %178 = vmatpush1.bf16.msra.mxu0 0
    %179 = vmatprep.mubr.bf16.mxu0 0
    %180 = vmatmul.mubr.bf16.gmra.mrb[0].mxu0 %v88
    %v181 = vpop.f32.mrb[0].mxu0
    %v182 = vadd.f32 0.0, %v181
    %v183 = vpop.f32.mrb[0].mxu0
    %v184 = vadd.f32 0.0, %v183
    %v185 = vpop.f32.mrb[0].mxu0
    %v186 = vpop.f32.mrb[0].mxu0
    %187 = vdwg.mxu0
    %v188 = vld [vmem:[%s3] sm:$0xff]
    %v189 = vld [vmem:[%s3 + $0x8] sm:$0xff]
    %v190 = vld [vmem:[%s3 + $0x10] sm:$0xff]
    %v191 = vld [vmem:[%s3 + $0x18] sm:$0xff]
    %v192 = vld [vmem:[%s3 + $0x20] sm:$0xff]
    %v193 = vld [vmem:[%s3 + $0x28] sm:$0xff]
    %v194 = vld [vmem:[%s3 + $0x30] sm:$0xff]
    %v195 = vld [vmem:[%s3 + $0x38] sm:$0xff]
    %v196 = vld [vmem:[%s3 + $0x40] sm:$0xff]
    %v197 = vld [vmem:[%s3 + $0x48] sm:$0xff]
    %v198 = vld [vmem:[%s3 + $0x50] sm:$0xff]
    %v199 = vld [vmem:[%s3 + $0x58] sm:$0xff]
    %v200 = vld [vmem:[%s3 + $0x60] sm:$0xff]
    %v201 = vld [vmem:[%s3 + $0x68] sm:$0xff]
    %v202 = vld [vmem:[%s3 + $0x70] sm:$0xff]
    %v203 = vld [vmem:[%s3 + $0x78] sm:$0xff]
    %v204 = vld [vmem:[%s3 + $0x80] sm:$0xff]
    %v205 = vld [vmem:[%s3 + $0x88] sm:$0xff]
    %v206 = vld [vmem:[%s3 + $0x90] sm:$0xff]
    %v207 = vld [vmem:[%s3 + $0x98] sm:$0xff]
    %v208 = vld [vmem:[%s3 + $0xa0] sm:$0xff]
    %v209 = vld [vmem:[%s3 + $0xa8] sm:$0xff]
    %v210 = vld [vmem:[%s3 + $0xb0] sm:$0xff]
    %v211 = vld [vmem:[%s3 + $0xb8] sm:$0xff]
    %v212 = vld [vmem:[%s3 + $0xc0] sm:$0xff]
    %v213 = vld [vmem:[%s3 + $0xc8] sm:$0xff]
    %v214 = vld [vmem:[%s3 + $0xd0] sm:$0xff]
    %v215 = vld [vmem:[%s3 + $0xd8] sm:$0xff]
    %v216 = vld [vmem:[%s3 + $0xe0] sm:$0xff]
    %v217 = vld [vmem:[%s3 + $0xe8] sm:$0xff]
    %v218 = vld [vmem:[%s3 + $0xf0] sm:$0xff]
    %v219 = vld [vmem:[%s3 + $0xf8] sm:$0xff]
    %v220 = vld [vmem:[%s3 + $0x100] sm:$0xff]
    %v221 = vld [vmem:[%s3 + $0x108] sm:$0xff]
    %v222 = vld [vmem:[%s3 + $0x110] sm:$0xff]
    %v223 = vld [vmem:[%s3 + $0x118] sm:$0xff]
    %v224 = vld [vmem:[%s3 + $0x120] sm:$0xff]
    %v225 = vld [vmem:[%s3 + $0x128] sm:$0xff]
    %v226 = vld [vmem:[%s3 + $0x130] sm:$0xff]
    %v227 = vld [vmem:[%s3 + $0x138] sm:$0xff]
    %v228 = vld [vmem:[%s3 + $0x140] sm:$0xff]
    %v229 = vld [vmem:[%s3 + $0x148] sm:$0xff]
    %v230 = vld [vmem:[%s3 + $0x150] sm:$0xff]
    %v231 = vld [vmem:[%s3 + $0x158] sm:$0xff]
    %v232 = vld [vmem:[%s3 + $0x160] sm:$0xff]
    %v233 = vld [vmem:[%s3 + $0x168] sm:$0xff]
    %v234 = vld [vmem:[%s3 + $0x170] sm:$0xff]
    %v235 = vld [vmem:[%s3 + $0x178] sm:$0xff]
    %v236 = vld [vmem:[%s3 + $0x180] sm:$0xff]
    %v237 = vld [vmem:[%s3 + $0x188] sm:$0xff]
    %v238 = vld [vmem:[%s3 + $0x190] sm:$0xff]
    %v239 = vld [vmem:[%s3 + $0x198] sm:$0xff]
    %v240 = vld [vmem:[%s3 + $0x1a0] sm:$0xff]
    %v241 = vld [vmem:[%s3 + $0x1a8] sm:$0xff]
    %v242 = vld [vmem:[%s3 + $0x1b0] sm:$0xff]
    %v243 = vld [vmem:[%s3 + $0x1b8] sm:$0xff]
    %v244 = vld [vmem:[%s3 + $0x1c0] sm:$0xff]
    %v245 = vld [vmem:[%s3 + $0x1c8] sm:$0xff]
    %v246 = vld [vmem:[%s3 + $0x1d0] sm:$0xff]
    %v247 = vld [vmem:[%s3 + $0x1d8] sm:$0xff]
    %v248 = vld [vmem:[%s3 + $0x1e0] sm:$0xff]
    %v249 = vld [vmem:[%s3 + $0x1e8] sm:$0xff]
    %v250 = vld [vmem:[%s3 + $0x1f0] sm:$0xff]
    %v251 = vld [vmem:[%s3 + $0x1f8] sm:$0xff]
    %252 = vmatprep.subr.mxu0 0.0
    %253 = vmatpush1.msra.mxu0 %v188
    %254 = vmatprep.subr.mxu0 0.0
    %255 = vmatpush1.msra.mxu0 %v189
    %256 = vmatprep.subr.mxu0 0.0
    %257 = vmatpush1.msra.mxu0 %v190
    %258 = vmatprep.subr.mxu0 0.0
    %259 = vmatpush1.msra.mxu0 %v191
    %260 = vmatprep.subr.mxu0 0.0
    %261 = vmatpush1.msra.mxu0 %v192
    %262 = vmatprep.subr.mxu0 0.0
    %263 = vmatpush1.msra.mxu0 %v193
    %264 = vmatprep.subr.mxu0 0.0
    %265 = vmatpush1.msra.mxu0 %v194
    %266 = vmatprep.subr.mxu0 0.0
    %267 = vmatpush1.msra.mxu0 %v195
    %268 = vmatprep.subr.mxu0 0.0
    %269 = vmatpush1.msra.mxu0 %v196
    %270 = vmatprep.subr.mxu0 0.0
    %271 = vmatpush1.msra.mxu0 %v197
    %272 = vmatprep.subr.mxu0 0.0
    %273 = vmatpush1.msra.mxu0 %v198
    %274 = vmatprep.subr.mxu0 0.0
    %275 = vmatpush1.msra.mxu0 %v199
    %276 = vmatprep.subr.mxu0 0.0
    %277 = vmatpush1.msra.mxu0 %v200
    %278 = vmatprep.subr.mxu0 0.0
    %279 = vmatpush1.msra.mxu0 %v201
    %280 = vmatprep.subr.mxu0 0.0
    %281 = vmatpush1.msra.mxu0 %v202
    %282 = vmatprep.subr.mxu0 0.0
    %283 = vmatpush1.msra.mxu0 %v203
    %284 = vmatprep.subr.mxu0 0.0
    %285 = vmatpush1.msra.mxu0 %v204
    %286 = vmatprep.subr.mxu0 0.0
    %287 = vmatpush1.msra.mxu0 %v205
    %288 = vmatprep.subr.mxu0 0.0
    %289 = vmatpush1.msra.mxu0 %v206
    %290 = vmatprep.subr.mxu0 0.0
    %291 = vmatpush1.msra.mxu0 %v207
    %292 = vmatprep.subr.mxu0 0.0
    %293 = vmatpush1.msra.mxu0 %v208
    %294 = vmatprep.subr.mxu0 0.0
    %295 = vmatpush1.msra.mxu0 %v209
    %296 = vmatprep.subr.mxu0 0.0
    %297 = vmatpush1.msra.mxu0 %v210
    %298 = vmatprep.subr.mxu0 0.0
    %299 = vmatpush1.msra.mxu0 %v211
    %300 = vmatprep.subr.mxu0 0.0
    %301 = vmatpush1.msra.mxu0 %v212
    %302 = vmatprep.subr.mxu0 0.0
    %303 = vmatpush1.msra.mxu0 %v213
    %304 = vmatprep.subr.mxu0 0.0
    %305 = vmatpush1.msra.mxu0 %v214
    %306 = vmatprep.subr.mxu0 0.0
    %307 = vmatpush1.msra.mxu0 %v215
    %308 = vmatprep.subr.mxu0 0.0
    %309 = vmatpush1.msra.mxu0 %v216
    %310 = vmatprep.subr.mxu0 0.0
    %311 = vmatpush1.msra.mxu0 %v217
    %312 = vmatprep.subr.mxu0 0.0
    %313 = vmatpush1.msra.mxu0 %v218
    %314 = vmatprep.subr.mxu0 0.0
    %315 = vmatpush1.msra.mxu0 %v219
    %316 = vmatprep.mubr.f32.mxu0 %v143
    %317 = vmatmul.mubr.f32.gmra.mrb[0].mxu0 %v141
    %v318 = vpop.f32.mrb[0].mxu0
    %v319 = vadd.f32 0.0, %v318
    %v320 = vpop.f32.mrb[0].mxu0
    %321 = vdwg.mxu0
    %322 = vmatprep.subr.mxu0 0.0
    %323 = vmatpush1.msra.mxu0 %v220
    %324 = vmatprep.subr.mxu0 0.0
    %325 = vmatpush1.msra.mxu0 %v221
    %326 = vmatprep.subr.mxu0 0.0
    %327 = vmatpush1.msra.mxu0 %v222
    %328 = vmatprep.subr.mxu0 0.0
    %329 = vmatpush1.msra.mxu0 %v223
    %330 = vmatprep.subr.mxu0 0.0
    %331 = vmatpush1.msra.mxu0 %v224
    %332 = vmatprep.subr.mxu0 0.0
    %333 = vmatpush1.msra.mxu0 %v225
    %334 = vmatprep.subr.mxu0 0.0
    %335 = vmatpush1.msra.mxu0 %v226
    %336 = vmatprep.subr.mxu0 0.0
    %337 = vmatpush1.msra.mxu0 %v227
    %338 = vmatprep.subr.mxu0 0.0
    %339 = vmatpush1.msra.mxu0 %v228
    %340 = vmatprep.subr.mxu0 0.0
    %341 = vmatpush1.msra.mxu0 %v229
    %342 = vmatprep.subr.mxu0 0.0
    %343 = vmatpush1.msra.mxu0 %v230
    %344 = vmatprep.subr.mxu0 0.0
    %345 = vmatpush1.msra.mxu0 %v231
    %346 = vmatprep.subr.mxu0 0.0
    %347 = vmatpush1.msra.mxu0 %v232
    %348 = vmatprep.subr.mxu0 0.0
    %349 = vmatpush1.msra.mxu0 %v233
    %350 = vmatprep.subr.mxu0 0.0
    %351 = vmatpush1.msra.mxu0 %v234
    %352 = vmatprep.subr.mxu0 0.0
    %353 = vmatpush1.msra.mxu0 %v235
    %354 = vmatprep.subr.mxu0 0.0
    %355 = vmatpush1.msra.mxu0 %v236
    %356 = vmatprep.subr.mxu0 0.0
    %357 = vmatpush1.msra.mxu0 %v237
    %358 = vmatprep.subr.mxu0 0.0
    %359 = vmatpush1.msra.mxu0 %v238
    %360 = vmatprep.subr.mxu0 0.0
    %361 = vmatpush1.msra.mxu0 %v239
    %362 = vmatprep.subr.mxu0 0.0
    %363 = vmatpush1.msra.mxu0 %v240
    %364 = vmatprep.subr.mxu0 0.0
    %365 = vmatpush1.msra.mxu0 %v241
    %366 = vmatprep.subr.mxu0 0.0
    %367 = vmatpush1.msra.mxu0 %v242
    %368 = vmatprep.subr.mxu0 0.0
    %369 = vmatpush1.msra.mxu0 %v243
    %370 = vmatprep.subr.mxu0 0.0
    %371 = vmatpush1.msra.mxu0 %v244
    %372 = vmatprep.subr.mxu0 0.0
    %373 = vmatpush1.msra.mxu0 %v245
    %374 = vmatprep.subr.mxu0 0.0
    %375 = vmatpush1.msra.mxu0 %v246
    %376 = vmatprep.subr.mxu0 0.0
    %377 = vmatpush1.msra.mxu0 %v247
    %378 = vmatprep.subr.mxu0 0.0
    %379 = vmatpush1.msra.mxu0 %v248
    %380 = vmatprep.subr.mxu0 0.0
    %381 = vmatpush1.msra.mxu0 %v249
    %382 = vmatprep.subr.mxu0 0.0
    %383 = vmatpush1.msra.mxu0 %v250
    %384 = vmatprep.subr.mxu0 0.0
    %385 = vmatpush1.msra.mxu0 %v251
    %386 = vmatprep.mubr.f32.mxu0 %v184
    %387 = vmatmul.mubr.f32.gmra.mrb[0].mxu0 %v182
    %v388 = vpop.f32.mrb[0].mxu0
    %v389 = vadd.f32 %v319, %v388
    %v390 = vpop.f32.mrb[0].mxu0
    %391 = vdwg.mxu0
    %v392 = vmul.f32 %v141, %v141
    %v393 = vmul.f32 %v143, %v143
    %v394 = vmul.f32 %v182, %v182
    %v395 = vmul.f32 %v184, %v184
    %396 = vmatprep.subr.mxu0 0.0
    %397 = vmatpush1.msra.mxu0 %v188
    %398 = vmatprep.subr.mxu0 0.0
    %399 = vmatpush1.msra.mxu0 %v189
    %400 = vmatprep.subr.mxu0 0.0
    %401 = vmatpush1.msra.mxu0 %v190
    %402 = vmatprep.subr.mxu0 0.0
    %403 = vmatpush1.msra.mxu0 %v191
    %404 = vmatprep.subr.mxu0 0.0
    %405 = vmatpush1.msra.mxu0 %v192
    %406 = vmatprep.subr.mxu0 0.0
    %407 = vmatpush1.msra.mxu0 %v193
    %408 = vmatprep.subr.mxu0 0.0
    %409 = vmatpush1.msra.mxu0 %v194
    %410 = vmatprep.subr.mxu0 0.0
    %411 = vmatpush1.msra.mxu0 %v195
    %412 = vmatprep.subr.mxu0 0.0
    %413 = vmatpush1.msra.mxu0 %v196
    %414 = vmatprep.subr.mxu0 0.0
    %415 = vmatpush1.msra.mxu0 %v197
    %416 = vmatprep.subr.mxu0 0.0
    %417 = vmatpush1.msra.mxu0 %v198
    %418 = vmatprep.subr.mxu0 0.0
    %419 = vmatpush1.msra.mxu0 %v199
    %420 = vmatprep.subr.mxu0 0.0
    %421 = vmatpush1.msra.mxu0 %v200
    %422 = vmatprep.subr.mxu0 0.0
    %423 = vmatpush1.msra.mxu0 %v201
    %424 = vmatprep.subr.mxu0 0.0
    %425 = vmatpush1.msra.mxu0 %v202
    %426 = vmatprep.subr.mxu0 0.0
    %427 = vmatpush1.msra.mxu0 %v203
    %428 = vmatprep.subr.mxu0 0.0
    %429 = vmatpush1.msra.mxu0 %v204
    %430 = vmatprep.subr.mxu0 0.0
    %431 = vmatpush1.msra.mxu0 %v205
    %432 = vmatprep.subr.mxu0 0.0
    %433 = vmatpush1.msra.mxu0 %v206
    %434 = vmatprep.subr.mxu0 0.0
    %435 = vmatpush1.msra.mxu0 %v207
    %436 = vmatprep.subr.mxu0 0.0
    %437 = vmatpush1.msra.mxu0 %v208
    %438 = vmatprep.subr.mxu0 0.0
    %439 = vmatpush1.msra.mxu0 %v209
    %440 = vmatprep.subr.mxu0 0.0
    %441 = vmatpush1.msra.mxu0 %v210
    %442 = vmatprep.subr.mxu0 0.0
    %443 = vmatpush1.msra.mxu0 %v211
    %444 = vmatprep.subr.mxu0 0.0
    %445 = vmatpush1.msra.mxu0 %v212
    %446 = vmatprep.subr.mxu0 0.0
    %447 = vmatpush1.msra.mxu0 %v213
    %448 = vmatprep.subr.mxu0 0.0
    %449 = vmatpush1.msra.mxu0 %v214
    %450 = vmatprep.subr.mxu0 0.0
    %451 = vmatpush1.msra.mxu0 %v215
    %452 = vmatprep.subr.mxu0 0.0
    %453 = vmatpush1.msra.mxu0 %v216
    %454 = vmatprep.subr.mxu0 0.0
    %455 = vmatpush1.msra.mxu0 %v217
    %456 = vmatprep.subr.mxu0 0.0
    %457 = vmatpush1.msra.mxu0 %v218
    %458 = vmatprep.subr.mxu0 0.0
    %459 = vmatpush1.msra.mxu0 %v219
    %460 = vmatprep.mubr.f32.mxu0 %v393
    %461 = vmatmul.mubr.f32.gmra.mrb[0].mxu0 %v392
    %v462 = vpop.f32.mrb[0].mxu0
    %v463 = vadd.f32 0.0, %v462
    %v464 = vpop.f32.mrb[0].mxu0
    %465 = vdwg.mxu0
    %466 = vmatprep.subr.mxu0 0.0
    %467 = vmatpush1.msra.mxu0 %v220
    %468 = vmatprep.subr.mxu0 0.0
    %469 = vmatpush1.msra.mxu0 %v221
    %470 = vmatprep.subr.mxu0 0.0
    %471 = vmatpush1.msra.mxu0 %v222
    %472 = vmatprep.subr.mxu0 0.0
    %473 = vmatpush1.msra.mxu0 %v223
    %474 = vmatprep.subr.mxu0 0.0
    %475 = vmatpush1.msra.mxu0 %v224
    %476 = vmatprep.subr.mxu0 0.0
    %477 = vmatpush1.msra.mxu0 %v225
    %478 = vmatprep.subr.mxu0 0.0
    %479 = vmatpush1.msra.mxu0 %v226
    %480 = vmatprep.subr.mxu0 0.0
    %481 = vmatpush1.msra.mxu0 %v227
    %482 = vmatprep.subr.mxu0 0.0
    %483 = vmatpush1.msra.mxu0 %v228
    %484 = vmatprep.subr.mxu0 0.0
    %485 = vmatpush1.msra.mxu0 %v229
    %486 = vmatprep.subr.mxu0 0.0
    %487 = vmatpush1.msra.mxu0 %v230
    %488 = vmatprep.subr.mxu0 0.0
    %489 = vmatpush1.msra.mxu0 %v231
    %490 = vmatprep.subr.mxu0 0.0
    %491 = vmatpush1.msra.mxu0 %v232
    %492 = vmatprep.subr.mxu0 0.0
    %493 = vmatpush1.msra.mxu0 %v233
    %494 = vmatprep.subr.mxu0 0.0
    %495 = vmatpush1.msra.mxu0 %v234
    %496 = vmatprep.subr.mxu0 0.0
    %497 = vmatpush1.msra.mxu0 %v235
    %498 = vmatprep.subr.mxu0 0.0
    %499 = vmatpush1.msra.mxu0 %v236
    %500 = vmatprep.subr.mxu0 0.0
    %501 = vmatpush1.msra.mxu0 %v237
    %502 = vmatprep.subr.mxu0 0.0
    %503 = vmatpush1.msra.mxu0 %v238
    %504 = vmatprep.subr.mxu0 0.0
    %505 = vmatpush1.msra.mxu0 %v239
    %506 = vmatprep.subr.mxu0 0.0
    %507 = vmatpush1.msra.mxu0 %v240
    %508 = vmatprep.subr.mxu0 0.0
    %509 = vmatpush1.msra.mxu0 %v241
    %510 = vmatprep.subr.mxu0 0.0
    %511 = vmatpush1.msra.mxu0 %v242
    %512 = vmatprep.subr.mxu0 0.0
    %513 = vmatpush1.msra.mxu0 %v243
    %514 = vmatprep.subr.mxu0 0.0
    %515 = vmatpush1.msra.mxu0 %v244
    %516 = vmatprep.subr.mxu0 0.0
    %517 = vmatpush1.msra.mxu0 %v245
    %518 = vmatprep.subr.mxu0 0.0
    %519 = vmatpush1.msra.mxu0 %v246
    %520 = vmatprep.subr.mxu0 0.0
    %521 = vmatpush1.msra.mxu0 %v247
    %522 = vmatprep.subr.mxu0 0.0
    %523 = vmatpush1.msra.mxu0 %v248
    %524 = vmatprep.subr.mxu0 0.0
    %525 = vmatpush1.msra.mxu0 %v249
    %526 = vmatprep.subr.mxu0 0.0
    %527 = vmatpush1.msra.mxu0 %v250
    %528 = vmatprep.subr.mxu0 0.0
    %529 = vmatpush1.msra.mxu0 %v251
    %530 = vmatprep.mubr.f32.mxu0 %v395
    %531 = vmatmul.mubr.f32.gmra.mrb[0].mxu0 %v394
    %v532 = vpop.f32.mrb[0].mxu0
    %v533 = vadd.f32 %v463, %v532
    %v534 = vpop.f32.mrb[0].mxu0
    %535 = vdwg.mxu0
    %v536 = vld [vmem:[%s2] sm:$0xff]
    %v537 = vld [vmem:[%s2 + $0x8] sm:$0xff]
    %vm538 = vcmask 130048
    %v540 = vsel %vm538, %v536, 0
    %v543 = vsel %vm538, %v537, 0
    %545 = vmatprep.subr.mxu0 0.0
    %546 = vmatpush1.msra.mxu0 %v389
    %547 = vmatprep.subr.mxu0 0.0
    %548 = vmatpush1.msra.mxu0 %v533
    %549 = vmatprep.subr.mxu0 0.0
    %550 = vmatpush1.msra.mxu0 0.0
    %551 = vmatprep.subr.mxu0 0.0
    %552 = vmatpush1.msra.mxu0 0.0
    %553 = vmatprep.subr.mxu0 0.0
    %554 = vmatpush1.msra.mxu0 0.0
    %555 = vmatprep.subr.mxu0 0.0
    %556 = vmatpush1.msra.mxu0 0.0
    %557 = vmatprep.subr.mxu0 0.0
    %558 = vmatpush1.msra.mxu0 0.0
    %559 = vmatprep.subr.mxu0 0.0
    %560 = vmatpush1.msra.mxu0 0.0
    %561 = vmatprep.subr.mxu0 0.0
    %562 = vmatpush1.msra.mxu0 0.0
    %563 = vmatprep.subr.mxu0 0.0
    %564 = vmatpush1.msra.mxu0 0.0
    %565 = vmatprep.subr.mxu0 0.0
    %566 = vmatpush1.msra.mxu0 0.0
    %567 = vmatprep.subr.mxu0 0.0
    %568 = vmatpush1.msra.mxu0 0.0
    %569 = vmatprep.subr.mxu0 0.0
    %570 = vmatpush1.msra.mxu0 0.0
    %571 = vmatprep.subr.mxu0 0.0
    %572 = vmatpush1.msra.mxu0 0.0
    %573 = vmatprep.subr.mxu0 0.0
    %574 = vmatpush1.msra.mxu0 0.0
    %575 = vmatprep.subr.mxu0 0.0
    %576 = vmatpush1.msra.mxu0 0.0
    %577 = vmatprep.subr.mxu0 0.0
    %578 = vmatpush1.msra.mxu0 0.0
    %579 = vmatprep.subr.mxu0 0.0
    %580 = vmatpush1.msra.mxu0 0.0
    %581 = vmatprep.subr.mxu0 0.0
    %582 = vmatpush1.msra.mxu0 0.0
    %583 = vmatprep.subr.mxu0 0.0
    %584 = vmatpush1.msra.mxu0 0.0
    %585 = vmatprep.subr.mxu0 0.0
    %586 = vmatpush1.msra.mxu0 0.0
    %587 = vmatprep.subr.mxu0 0.0
    %588 = vmatpush1.msra.mxu0 0.0
    %589 = vmatprep.subr.mxu0 0.0
    %590 = vmatpush1.msra.mxu0 0.0
    %591 = vmatprep.subr.mxu0 0.0
    %592 = vmatpush1.msra.mxu0 0.0
    %593 = vmatprep.subr.mxu0 0.0
    %594 = vmatpush1.msra.mxu0 0.0
    %595 = vmatprep.subr.mxu0 0.0
    %596 = vmatpush1.msra.mxu0 0.0
    %597 = vmatprep.subr.mxu0 0.0
    %598 = vmatpush1.msra.mxu0 0.0
    %599 = vmatprep.subr.mxu0 0.0
    %600 = vmatpush1.msra.mxu0 0.0
    %601 = vmatprep.subr.mxu0 0.0
    %602 = vmatpush1.msra.mxu0 0.0
    %603 = vmatprep.subr.mxu0 0.0
    %604 = vmatpush1.msra.mxu0 0.0
    %605 = vmatprep.subr.mxu0 0.0
    %606 = vmatpush1.msra.mxu0 0.0
    %607 = vmatprep.subr.mxu0 0.0
    %608 = vmatpush1.msra.mxu0 0.0
    %609 = vmatprep.mubr.f32.mxu0 0.0
    %610 = vmatmul.mubr.f32.gmra.mrb[0].mxu0 %v540
    %v611 = vpop.f32.mrb[0].mxu0
    %v612 = vadd.f32 0.0, %v611
    %v613 = vpop.f32.mrb[0].mxu0
    %614 = vmatprep.mubr.f32.mxu0 0.0
    %615 = vmatmul.mubr.f32.gmra.mrb[0].mxu0 %v543
    %v616 = vpop.f32.mrb[0].mxu0
    %v617 = vadd.f32 0.0, %v616
    %v618 = vpop.f32.mrb[0].mxu0
    %619 = vdwg.mxu0
    %v620 = vmul.f32 %v612, 0.0009765625
    %v621 = vmul.f32 %v617, 0.0009765625
    %v622 = vmul.f32 %v620, %v620
    %v623 = vsub.f32 %v621, %v622
    %v624 = vadd.f32 %v623, 1e-05
    %v625 = vrsqrt.pop %v624
    %v626 = vld [vmem:[%s5] sm:$0xff]
    %628 = vset.pattern.permute.xlu0 0
    %629 = vperm.xlu0 %628, %v626
    %v630 = vpop.permute.xlu0 %629
    %v632 = vmul.f32 %v630, %v625
    %v633 = vmul.f32 %v620, %v632
    %634 = vset.pattern.permute.xlu0 1
    %635 = vperm.xlu0 %634, %v626
    %v636 = vpop.permute.xlu0 %635
    %v638 = vsub.f32 %v636, %v633
    %v639 = vld [vmem:[%s4] sm:$0xff]
    %v641 = vcombine.high %v639, %v639
    %v643 = vunpack.c.l.s4 1983009808
    %v644 = vunpack.c.0.s8 %v643
    %v645 = vlaneseq
    %v646 = vshrl.u32 %v645, 7
    %v647 = vsub.s32 %v644, %v646
    %v648 = vrot.slane %v639, %v647
    %v650 = vunpack.c.l.s4 1983009808
    %v651 = vunpack.c.0.s8 %v650
    %v652 = vlaneseq
    %v653 = vshrl.u32 %v652, 7
    %v654 = vsub.s32 %v651, %v653
    %v655 = vrot.slane %v641, %v654
    %v656 = vcombine.high %v648, %v648
    %v657 = vcombine.high %v655, %v655
    %vm658 = vcmask 15360
    %v660 = vsel %vm658, %v632, 0
    %v663 = vsel %vm658, %v638, 0
    %v665 = vsel %vm90, %v648, 0
    %v667 = vsel %vm90, %v656, 0
    %v669 = vsel %vm90, %v655, 0
    %v671 = vsel %vm90, %v657, 0
    %673 = vmatprep.subr.mxu0 %v667
    %674 = vmatpush1.msra.mxu0 %v665
    %675 = vmatprep.subr.mxu0 0.0
    %676 = vmatpush1.msra.mxu0 0.0
    %677 = vmatprep.subr.mxu0 0.0
    %678 = vmatpush1.msra.mxu0 0.0
    %679 = vmatprep.subr.mxu0 0.0
    %680 = vmatpush1.msra.mxu0 0.0
    %681 = vmatprep.subr.mxu0 0.0
    %682 = vmatpush1.msra.mxu0 0.0
    %683 = vmatprep.subr.mxu0 0.0
    %684 = vmatpush1.msra.mxu0 0.0
    %685 = vmatprep.subr.mxu0 0.0
    %686 = vmatpush1.msra.mxu0 0.0
    %687 = vmatprep.subr.mxu0 0.0
    %688 = vmatpush1.msra.mxu0 0.0
    %689 = vmatprep.subr.mxu0 0.0
    %690 = vmatpush1.msra.mxu0 0.0
    %691 = vmatprep.subr.mxu0 0.0
    %692 = vmatpush1.msra.mxu0 0.0
    %693 = vmatprep.subr.mxu0 0.0
    %694 = vmatpush1.msra.mxu0 0.0
    %695 = vmatprep.subr.mxu0 0.0
    %696 = vmatpush1.msra.mxu0 0.0
    %697 = vmatprep.subr.mxu0 0.0
    %698 = vmatpush1.msra.mxu0 0.0
    %699 = vmatprep.subr.mxu0 0.0
    %700 = vmatpush1.msra.mxu0 0.0
    %701 = vmatprep.subr.mxu0 0.0
    %702 = vmatpush1.msra.mxu0 0.0
    %703 = vmatprep.subr.mxu0 0.0
    %704 = vmatpush1.msra.mxu0 0.0
    %705 = vmatprep.subr.mxu0 0.0
    %706 = vmatpush1.msra.mxu0 0.0
    %707 = vmatprep.subr.mxu0 0.0
    %708 = vmatpush1.msra.mxu0 0.0
    %709 = vmatprep.subr.mxu0 0.0
    %710 = vmatpush1.msra.mxu0 0.0
    %711 = vmatprep.subr.mxu0 0.0
    %712 = vmatpush1.msra.mxu0 0.0
    %713 = vmatprep.subr.mxu0 0.0
    %714 = vmatpush1.msra.mxu0 0.0
    %715 = vmatprep.subr.mxu0 0.0
    %716 = vmatpush1.msra.mxu0 0.0
    %717 = vmatprep.subr.mxu0 0.0
    %718 = vmatpush1.msra.mxu0 0.0
    %719 = vmatprep.subr.mxu0 0.0
    %720 = vmatpush1.msra.mxu0 0.0
    %721 = vmatprep.subr.mxu0 0.0
    %722 = vmatpush1.msra.mxu0 0.0
    %723 = vmatprep.subr.mxu0 0.0
    %724 = vmatpush1.msra.mxu0 0.0
    %725 = vmatprep.subr.mxu0 0.0
    %726 = vmatpush1.msra.mxu0 0.0
    %727 = vmatprep.subr.mxu0 0.0
    %728 = vmatpush1.msra.mxu0 0.0
    %729 = vmatprep.subr.mxu0 0.0
    %730 = vmatpush1.msra.mxu0 0.0
    %731 = vmatprep.subr.mxu0 0.0
    %732 = vmatpush1.msra.mxu0 0.0
    %733 = vmatprep.subr.mxu0 0.0
    %734 = vmatpush1.msra.mxu0 0.0
    %735 = vmatprep.subr.mxu0 0.0
    %736 = vmatpush1.msra.mxu0 0.0
    %737 = vmatprep.mubr.f32.mxu0 0.0
    %738 = vmatmul.mubr.f32.gmra.mrb[0].mxu0 %v660
    %v739 = vpop.f32.mrb[0].mxu0
    %v740 = vadd.f32 0.0, %v739
    %v741 = vpop.f32.mrb[0].mxu0
    %v742 = vadd.f32 0.0, %v741
    %743 = vmatprep.mubr.f32.mxu0 0.0
    %744 = vmatmul.mubr.f32.gmra.mrb[0].mxu0 %v663
    %v745 = vpop.f32.mrb[0].mxu0
    %v746 = vadd.f32 0.0, %v745
    %v747 = vpop.f32.mrb[0].mxu0
    %v748 = vadd.f32 0.0, %v747
    %749 = vdwg.mxu0
    %750 = vmatprep.subr.mxu0 %v671
    %751 = vmatpush1.msra.mxu0 %v669
    %752 = vmatprep.subr.mxu0 0.0
    %753 = vmatpush1.msra.mxu0 0.0
    %754 = vmatprep.subr.mxu0 0.0
    %755 = vmatpush1.msra.mxu0 0.0
    %756 = vmatprep.subr.mxu0 0.0
    %757 = vmatpush1.msra.mxu0 0.0
    %758 = vmatprep.subr.mxu0 0.0
    %759 = vmatpush1.msra.mxu0 0.0
    %760 = vmatprep.subr.mxu0 0.0
    %761 = vmatpush1.msra.mxu0 0.0
    %762 = vmatprep.subr.mxu0 0.0
    %763 = vmatpush1.msra.mxu0 0.0
    %764 = vmatprep.subr.mxu0 0.0
    %765 = vmatpush1.msra.mxu0 0.0
    %766 = vmatprep.subr.mxu0 0.0
    %767 = vmatpush1.msra.mxu0 0.0
    %768 = vmatprep.subr.mxu0 0.0
    %769 = vmatpush1.msra.mxu0 0.0
    %770 = vmatprep.subr.mxu0 0.0
    %771 = vmatpush1.msra.mxu0 0.0
    %772 = vmatprep.subr.mxu0 0.0
    %773 = vmatpush1.msra.mxu0 0.0
    %774 = vmatprep.subr.mxu0 0.0
    %775 = vmatpush1.msra.mxu0 0.0
    %776 = vmatprep.subr.mxu0 0.0
    %777 = vmatpush1.msra.mxu0 0.0
    %778 = vmatprep.subr.mxu0 0.0
    %779 = vmatpush1.msra.mxu0 0.0
    %780 = vmatprep.subr.mxu0 0.0
    %781 = vmatpush1.msra.mxu0 0.0
    %782 = vmatprep.subr.mxu0 0.0
    %783 = vmatpush1.msra.mxu0 0.0
    %784 = vmatprep.subr.mxu0 0.0
    %785 = vmatpush1.msra.mxu0 0.0
    %786 = vmatprep.subr.mxu0 0.0
    %787 = vmatpush1.msra.mxu0 0.0
    %788 = vmatprep.subr.mxu0 0.0
    %789 = vmatpush1.msra.mxu0 0.0
    %790 = vmatprep.subr.mxu0 0.0
    %791 = vmatpush1.msra.mxu0 0.0
    %792 = vmatprep.subr.mxu0 0.0
    %793 = vmatpush1.msra.mxu0 0.0
    %794 = vmatprep.subr.mxu0 0.0
    %795 = vmatpush1.msra.mxu0 0.0
    %796 = vmatprep.subr.mxu0 0.0
    %797 = vmatpush1.msra.mxu0 0.0
    %798 = vmatprep.subr.mxu0 0.0
    %799 = vmatpush1.msra.mxu0 0.0
    %800 = vmatprep.subr.mxu0 0.0
    %801 = vmatpush1.msra.mxu0 0.0
    %802 = vmatprep.subr.mxu0 0.0
    %803 = vmatpush1.msra.mxu0 0.0
    %804 = vmatprep.subr.mxu0 0.0
    %805 = vmatpush1.msra.mxu0 0.0
    %806 = vmatprep.subr.mxu0 0.0
    %807 = vmatpush1.msra.mxu0 0.0
    %808 = vmatprep.subr.mxu0 0.0
    %809 = vmatpush1.msra.mxu0 0.0
    %810 = vmatprep.subr.mxu0 0.0
    %811 = vmatpush1.msra.mxu0 0.0
    %812 = vmatprep.subr.mxu0 0.0
    %813 = vmatpush1.msra.mxu0 0.0
    %814 = vmatprep.mubr.f32.mxu0 0.0
    %815 = vmatmul.mubr.f32.gmra.mrb[0].mxu0 %v660
    %v816 = vpop.f32.mrb[0].mxu0
    %v817 = vadd.f32 0.0, %v816
    %v818 = vpop.f32.mrb[0].mxu0
    %v819 = vadd.f32 0.0, %v818
    %820 = vmatprep.mubr.f32.mxu0 0.0
    %821 = vmatmul.mubr.f32.gmra.mrb[0].mxu0 %v663
    %v822 = vpop.f32.mrb[0].mxu0
    %v823 = vadd.f32 0.0, %v822
    %v824 = vpop.f32.mrb[0].mxu0
    %v825 = vadd.f32 0.0, %v824
    %826 = vdwg.mxu0
    %v827 = vmul.f32 %v141, %v740
    %v828 = vmul.f32 %v143, %v742
    %v829 = vmul.f32 %v182, %v817
    %v830 = vmul.f32 %v184, %v819
    %v831 = vadd.f32 %v827, %v746
    %v832 = vadd.f32 %v828, %v748
    %v833 = vadd.f32 %v829, %v823
    %v834 = vadd.f32 %v830, %v825
    %v835 = vxor.u32 %v831, 2147483648
    %v836 = vxor.u32 %v832, 2147483648
    %v837 = vxor.u32 %v833, 2147483648
    %v838 = vxor.u32 %v834, 2147483648
    %v839 = vmul.f32 %v835, 1.442695
    %v840 = vpow.pop %v839
    %v841 = vmul.f32 %v836, 1.442695
    %v842 = vpow.pop %v841
    %v843 = vmul.f32 %v837, 1.442695
    %v844 = vpow.pop %v843
    %v845 = vmul.f32 %v838, 1.442695
    %v846 = vpow.pop %v845
    %v847 = vadd.f32 %v840, 1.0
    %v848 = vadd.f32 %v842, 1.0
    %v849 = vadd.f32 %v844, 1.0
    %v850 = vadd.f32 %v846, 1.0
    %v851 = vrcp.pop %v847
    %v852 = vmul.f32 1.0, %v851
    %v853 = vrcp.pop %v848
    %v854 = vmul.f32 1.0, %v853
    %v855 = vrcp.pop %v849
    %v856 = vmul.f32 1.0, %v855
    %v857 = vrcp.pop %v850
    %v858 = vmul.f32 1.0, %v857
    %v859 = vmul.f32 %v831, %v852
    %v860 = vmul.f32 %v832, %v854
    %v861 = vmul.f32 %v833, %v856
    %v862 = vmul.f32 %v834, %v858
    %863 = vst [vmem:[#allocation2] sm:$0xff] %v859
    %864 = vst [vmem:[#allocation2 + $0x8] sm:$0xff] %v860
    %865 = vst [vmem:[#allocation2 + $0x10] sm:$0xff] %v861
    %866 = vst [vmem:[#allocation2 + $0x18] sm:$0xff] %v862
    // Predicated region
    $region26: #{tpu_custom_call.1} parent=1 // pred_check
      _
    $region27: #{tpu_custom_call.1} parent=1 // pred_check_branch
      %868 = sbr.rel (0) target = $region29
    $region28: #{tpu_custom_call.1} parent=1 // pred_region
      %s870 = ssub.s32 512, 512
      %871 = vsyncadd [#allocation3], %s870
      %s873 = sshll.u32 [#allocation2], 4
      %s874 = int_to_ptr.vmem [resolvable:$true] %s873
      %876 = dma.vmem_to_hbm [thread:$0]  %s874, 512, %s6, [#allocation3]
    $region29: #{tpu_custom_call.1} parent=1 // pred_fallthru
      _
    // Predicated region
    $region30: #{tpu_custom_call.1} parent=1 // pred_check
      _
    $region31: #{tpu_custom_call.1} parent=1 // pred_check_branch
      %878 = sbr.rel (0) target = $region33
    $region32: #{tpu_custom_call.1} parent=1 // pred_region
      %879 = dma.done [#allocation3], 512
    $region33: #{tpu_custom_call.1} parent=1 // pred_fallthru
      _
    %880 = vsyncpa [#allocation3], 1

</llo_original>
